<compile_context>
chip_gen: v7x
topology: tpu7x:2x2x1
jax: 0.10.0
libtpu: 0.0.40
codegen_flags: <defaults>
</compile_context>

<pallas_src>
import functools

import numpy as np
import jax
import jax.numpy as jnp
from jax.experimental import pallas as pl
from jax.experimental.pallas import tpu as pltpu


# -----------------------------------------------------------------------------
# Kernel
# -----------------------------------------------------------------------------
def psd_kernel(q_ref, w1_ref, b1_ref, w2_ref, b2_ref, w3_ref, b3_ref,
               wab_ref, bab_ref, add_ref, out_ref, *, d, dd):
    d3 = d * dd

    def mm(x, w_ref, b_ref):
        # Operands may be bf16 (v6e/v7x option); accumulation always f32.
        return jnp.dot(x.astype(w_ref.dtype), w_ref[...],
                       preferred_element_type=jnp.float32) + b_ref[...]

    # MLP hot path: MXU matmuls + EUP tanh (f32 activations).
    h = jnp.tanh(mm(q_ref[...], w1_ref, b1_ref))
    h = jnp.tanh(mm(h, w2_ref, b2_ref))
    h = jnp.tanh(mm(h, w3_ref, b3_ref))

    # Fused projection: ab[:, :d3] = A, ab[:, d3:] = B, where
    #   A[b, j*dd + i*d + k] = L[b, i, j]
    #   B[b, j*dd + i*d + k] = L[b, k, j]
    # For d=4 this is one exactly lane-dense 128-wide matmul.
    ab = mm(h, wab_ref, bab_ref)

    # prod[:, j*dd + i*d + k] = L[i,j] * L[k,j]; the 2*d3-wide array is
    # periodic with period d3 (both halves identical), so all following
    # rolls are direction-agnostic.
    prod = ab * pltpu.roll(ab, shift=d3, axis=1)

    # Sum over j via XLU rolls + VPU adds (replaces the old K-padded / N=16
    # MXU pass). Log-tree when d is a power of two, linear chain otherwise.
    s = prod
    if d & (d - 1) == 0:
        g = d
        while g > 1:
            g //= 2
            s = s + pltpu.roll(s, shift=g * dd, axis=1)
    else:
        for j in range(1, d):
            s = s + pltpu.roll(prod, shift=j * dd, axis=1)

    # D_flat[b, i*d+k] = sum_j L[i,j] L[k,j]; +0.1 at (0,0) and (1,1).
    out_ref[...] = s[:, :dd] + add_ref[...]


# -----------------------------------------------------------------------------
# Wrapper
# -----------------------------------------------------------------------------
def psd_forward(q, kparams, diag_dim, *, block_batch=4096,
                vmem_budget_bytes=16 << 20):
    """Runs the PSD forward pass. q: (bs, input_dim) float32."""
    bs, input_dim = q.shape
    d = diag_dim
    dd = d * d
    d3 = d * dd
    hidden = kparams[0].shape[1]

    # --- Batch tile selection ------------------------------------------------
    # Per-row live VMEM (f32 words): q/out double-buffered blocks + h +
    # ab/prod/roll intermediates.  Conservative upper bound.
    bytes_per_row = 4 * (2 * input_dim + 2 * dd + 3 * hidden + 4 * (2 * d3))
    tb_budget = max(8, (vmem_budget_bytes // max(bytes_per_row, 1)) // 8 * 8)

    tb = min(block_batch, tb_budget, bs)
    if bs >= 32:
        # Keep >= 4 grid steps so both v7x TensorCores get work and the
        # auto-pipeline can double-buffer the q/out DMAs.
        tb = min(tb, pl.cdiv(bs, 4))
    if tb < bs:
        tb = max(8, (tb // 8) * 8)       # sublane-friendly tile
    grid = (pl.cdiv(bs, tb),)

    # Partial last tile: Pallas masks the writeback of padded rows; padded
    # input rows flow through tanh with garbage data, which is fine since the
    # kernel never reduces over the batch axis.
    q_spec = pl.BlockSpec((tb, input_dim), lambda i: (i, 0))
    const_specs = [pl.BlockSpec(p.shape, lambda i: (0, 0)) for p in kparams]
    out_spec = pl.BlockSpec((tb, dd), lambda i: (i, 0))

    kernel = functools.partial(psd_kernel, d=d, dd=dd)

    d_flat = pl.pallas_call(
        kernel,
        out_shape=jax.ShapeDtypeStruct((bs, dd), jnp.float32),
        grid=grid,
        in_specs=[q_spec] + const_specs,
        out_specs=out_spec,
        compiler_params=pltpu.CompilerParams(
            dimension_semantics=("parallel",),
            vmem_limit_bytes=32 * 1024 * 1024),
    )(q, *kparams)
    return d_flat.reshape(bs, d, d)


# -----------------------------------------------------------------------------
# Parameters (raw torch-equivalent params + host-side folding for the kernel)
# -----------------------------------------------------------------------------
def make_params(key, input_dim, hidden_dim, diag_dim):
    """Raw params mirroring the module. Weights orthogonal (like torch
    orthogonal_), stored transposed as (in, out); biases uniform
    (-1/sqrt(fan_in), 1/sqrt(fan_in)), shape (1, out)."""
    off_dim = diag_dim * (diag_dim - 1) // 2
    dims = [(input_dim, hidden_dim),
            (hidden_dim, hidden_dim),
            (hidden_dim, hidden_dim),
            (hidden_dim, diag_dim + off_dim)]
    ortho = jax.nn.initializers.orthogonal()
    params = []
    for fan_in, fan_out in dims:
        key, kw, kb = jax.random.split(key, 3)
        w = ortho(kw, (fan_out, fan_in), jnp.float32).T      # (in, out)
        bound = 1.0 / np.sqrt(fan_in)
        b = jax.random.uniform(kb, (1, fan_out), jnp.float32, -bound, bound)
        params.extend([w, b])
    return tuple(params)


def prepare_kernel_params(raw_params, diag_dim, *, matmul_dtype=jnp.float32):
    """Fold the L-scatter and the Gram-matrix gathers into the last layer,
    fusing A and B into one (hidden, 2*d^3) weight.

    All host matmuls below multiply by 0/1 matrices with at most one 1 per
    column, i.e. they are exact column gathers — no numerical change.
    `matmul_dtype=jnp.bfloat16` is the v6e/v7x fast path (f32 accumulation is
    kept in-kernel); default f32 preserves exact numerics.
    """
    assert diag_dim >= 2, "diag_dim == 1 branch is not implemented"
    w1, b1, w2, b2, w3, b3, w4, b4 = raw_params
    d = diag_dim
    dd = d * d
    d3 = d * dd
    off_dim = d * (d - 1) // 2

    # S: (d + off_dim, d*d) scatters (diag, off_diag) into flattened L
    # (row-major, torch tril order).
    S = np.zeros((d + off_dim, dd), np.float32)
    for i in range(d):
        S[i, i * d + i] = 1.0
    rows, cols = np.tril_indices(d, k=-1)
    flat_ind = np.ravel_multi_index((rows, cols), (d, d))
    for m, f in enumerate(flat_ind):
        S[d + m, f] = 1.0

    # Gathers for the vectorized Gram epilogue.
    Prow = np.zeros((dd, d3), np.float32)   # A[:, j*dd + i*d + k] = L[:,i,j]
    Pcol = np.zeros((dd, d3), np.float32)   # B[:, j*dd + i*d + k] = L[:,k,j]
    for j in range(d):
        for i in range(d):
            for k in range(d):
                c = j * dd + i * d + k
                Prow[i * d + j, c] = 1.0
                Pcol[k * d + j, c] = 1.0

    w4p = np.asarray(w4) @ S                 # (hidden, d*d)
    b4p = np.asarray(b4) @ S                 # (1, d*d)
    wab = np.concatenate([w4p @ Prow, w4p @ Pcol], axis=1)   # (hidden, 2*d^3)
    bab = np.concatenate([b4p @ Prow, b4p @ Pcol], axis=1)   # (1, 2*d^3)

    add01 = np.zeros((1, dd), np.float32)    # +0.1 at (0,0) and (1,1)
    add01[0, 0] = 0.1
    add01[0, d + 1] = 0.1

    wdt = matmul_dtype
    return (jnp.asarray(w1, wdt), jnp.asarray(b1, jnp.float32),
            jnp.asarray(w2, wdt), jnp.asarray(b2, jnp.float32),
            jnp.asarray(w3, wdt), jnp.asarray(b3, jnp.float32),
            jnp.asarray(wab, wdt), jnp.asarray(bab, jnp.float32),
            jnp.asarray(add01, jnp.float32))


# -----------------------------------------------------------------------------
# Pure-JAX reference (mirrors the PyTorch forward, diag_dim > 1)
# -----------------------------------------------------------------------------
def psd_reference(q, raw_params, diag_dim):
    w1, b1, w2, b2, w3, b3, w4, b4 = raw_params
    h = jnp.tanh(q @ w1 + b1)
    h = jnp.tanh(h @ w2 + b2)
    h = jnp.tanh(h @ w3 + b3)
    z = h @ w4 + b4
    diag, off = z[:, :diag_dim], z[:, diag_dim:]
    L = jax.vmap(jnp.diag)(diag)
    ind = np.tril_indices(diag_dim, k=-1)
    L = L.at[:, ind[0], ind[1]].set(off)
    D = jnp.einsum('bij,bkj->bik', L, L)
    D = D.at[:, 0, 0].add(0.1).at[:, 1, 1].add(0.1)
    return D


if __name__ == "__main__":
    INPUT_DIM, HIDDEN_DIM, DIAG_DIM = 8, 32, 4
    BATCH = 64   # small, but enough rows for multiple grid steps

    key = jax.random.PRNGKey(0)
    kq, kp = jax.random.split(key)
    q = jax.random.normal(kq, (BATCH, INPUT_DIM), jnp.float32)
    raw_params = make_params(kp, INPUT_DIM, HIDDEN_DIM, DIAG_DIM)
    kparams = prepare_kernel_params(raw_params, DIAG_DIM)   # f32 (exact)

    fwd = jax.jit(functools.partial(psd_forward, diag_dim=DIAG_DIM))
    D = jax.block_until_ready(fwd(q, kparams))

    D_ref = psd_reference(q, raw_params, DIAG_DIM)
    np.testing.assert_allclose(np.asarray(D), np.asarray(D_ref),
                               rtol=1e-3, atol=1e-3)
    print("KERNEL_OK")
</pallas_src>

<mosaic_0001>
module attributes {stable_mosaic.version = 11 : i64} {
  func.func @psd_kernel(%arg0: i32, %arg1: memref<16x8xf32, #tpu.memory_space<vmem>>, %arg2: memref<8x32xf32, #tpu.memory_space<vmem>>, %arg3: memref<1x32xf32, #tpu.memory_space<vmem>>, %arg4: memref<32x32xf32, #tpu.memory_space<vmem>>, %arg5: memref<1x32xf32, #tpu.memory_space<vmem>>, %arg6: memref<32x32xf32, #tpu.memory_space<vmem>>, %arg7: memref<1x32xf32, #tpu.memory_space<vmem>>, %arg8: memref<32x128xf32, #tpu.memory_space<vmem>>, %arg9: memref<1x128xf32, #tpu.memory_space<vmem>>, %arg10: memref<1x16xf32, #tpu.memory_space<vmem>>, %arg11: memref<16x16xf32, #tpu.memory_space<vmem>>) attributes {dimension_semantics = [#tpu.dimension_semantics<parallel>], iteration_bounds = array<i64: 4>, scalar_prefetch = 0 : i64, scratch_operands = 0 : i64, tpu.core_type = #tpu.core_type<tc>, window_params = [{transform_indices = @transform_0, window_bounds = array<i64: 16, 8>}, {pipeline_mode = #tpu.pipeline_mode<synchronous>, transform_indices = @transform_1, window_bounds = array<i64: 8, 32>}, {pipeline_mode = #tpu.pipeline_mode<synchronous>, transform_indices = @transform_2, window_bounds = array<i64: 1, 32>}, {pipeline_mode = #tpu.pipeline_mode<synchronous>, transform_indices = @transform_3, window_bounds = array<i64: 32, 32>}, {pipeline_mode = #tpu.pipeline_mode<synchronous>, transform_indices = @transform_4, window_bounds = array<i64: 1, 32>}, {pipeline_mode = #tpu.pipeline_mode<synchronous>, transform_indices = @transform_5, window_bounds = array<i64: 32, 32>}, {pipeline_mode = #tpu.pipeline_mode<synchronous>, transform_indices = @transform_6, window_bounds = array<i64: 1, 32>}, {pipeline_mode = #tpu.pipeline_mode<synchronous>, transform_indices = @transform_7, window_bounds = array<i64: 32, 128>}, {pipeline_mode = #tpu.pipeline_mode<synchronous>, transform_indices = @transform_8, window_bounds = array<i64: 1, 128>}, {pipeline_mode = #tpu.pipeline_mode<synchronous>, transform_indices = @transform_9, window_bounds = array<i64: 1, 16>}, {transform_indices = @transform_10, window_bounds = array<i64: 16, 16>}]} {
    %c0 = arith.constant 0 : index
    %c0_0 = arith.constant 0 : index
    %0 = vector.load %arg1[%c0, %c0_0] : memref<16x8xf32, #tpu.memory_space<vmem>>, vector<16x8xf32>
    %c0_1 = arith.constant 0 : index
    %c0_2 = arith.constant 0 : index
    %1 = vector.load %arg2[%c0_1, %c0_2] : memref<8x32xf32, #tpu.memory_space<vmem>>, vector<8x32xf32>
    %cst = arith.constant dense<0.000000e+00> : vector<16x32xf32>
    %2 = tpu.matmul %0, %1, %cst {dimension_numbers = #tpu.dot_dimension_numbers<[1], [0], [0], [1], [0, 0, 1, 1], [], []>} : vector<16x8xf32>, vector<8x32xf32>, vector<16x32xf32> -> vector<16x32xf32>
    %c0_3 = arith.constant 0 : index
    %c0_4 = arith.constant 0 : index
    %3 = vector.load %arg3[%c0_3, %c0_4] : memref<1x32xf32, #tpu.memory_space<vmem>>, vector<1x32xf32>
    %4 = vector.broadcast %3 : vector<1x32xf32> to vector<16x32xf32>
    %5 = arith.addf %2, %4 : vector<16x32xf32>
    %6 = math.tanh %5 : vector<16x32xf32>
    %c0_5 = arith.constant 0 : index
    %c0_6 = arith.constant 0 : index
    %7 = vector.load %arg4[%c0_5, %c0_6] : memref<32x32xf32, #tpu.memory_space<vmem>>, vector<32x32xf32>
    %cst_7 = arith.constant dense<0.000000e+00> : vector<16x32xf32>
    %8 = tpu.matmul %6, %7, %cst_7 {dimension_numbers = #tpu.dot_dimension_numbers<[1], [0], [0], [1], [0, 0, 1, 1], [], []>} : vector<16x32xf32>, vector<32x32xf32>, vector<16x32xf32> -> vector<16x32xf32>
    %c0_8 = arith.constant 0 : index
    %c0_9 = arith.constant 0 : index
    %9 = vector.load %arg5[%c0_8, %c0_9] : memref<1x32xf32, #tpu.memory_space<vmem>>, vector<1x32xf32>
    %10 = vector.broadcast %9 : vector<1x32xf32> to vector<16x32xf32>
    %11 = arith.addf %8, %10 : vector<16x32xf32>
    %12 = math.tanh %11 : vector<16x32xf32>
    %c0_10 = arith.constant 0 : index
    %c0_11 = arith.constant 0 : index
    %13 = vector.load %arg6[%c0_10, %c0_11] : memref<32x32xf32, #tpu.memory_space<vmem>>, vector<32x32xf32>
    %cst_12 = arith.constant dense<0.000000e+00> : vector<16x32xf32>
    %14 = tpu.matmul %12, %13, %cst_12 {dimension_numbers = #tpu.dot_dimension_numbers<[1], [0], [0], [1], [0, 0, 1, 1], [], []>} : vector<16x32xf32>, vector<32x32xf32>, vector<16x32xf32> -> vector<16x32xf32>
    %c0_13 = arith.constant 0 : index
    %c0_14 = arith.constant 0 : index
    %15 = vector.load %arg7[%c0_13, %c0_14] : memref<1x32xf32, #tpu.memory_space<vmem>>, vector<1x32xf32>
    %16 = vector.broadcast %15 : vector<1x32xf32> to vector<16x32xf32>
    %17 = arith.addf %14, %16 : vector<16x32xf32>
    %18 = math.tanh %17 : vector<16x32xf32>
    %c0_15 = arith.constant 0 : index
    %c0_16 = arith.constant 0 : index
    %19 = vector.load %arg8[%c0_15, %c0_16] : memref<32x128xf32, #tpu.memory_space<vmem>>, vector<32x128xf32>
    %cst_17 = arith.constant dense<0.000000e+00> : vector<16x128xf32>
    %20 = tpu.matmul %18, %19, %cst_17 {dimension_numbers = #tpu.dot_dimension_numbers<[1], [0], [0], [1], [0, 0, 1, 1], [], []>} : vector<16x32xf32>, vector<32x128xf32>, vector<16x128xf32> -> vector<16x128xf32>
    %c0_18 = arith.constant 0 : index
    %c0_19 = arith.constant 0 : index
    %21 = vector.load %arg9[%c0_18, %c0_19] : memref<1x128xf32, #tpu.memory_space<vmem>>, vector<1x128xf32>
    %22 = vector.broadcast %21 : vector<1x128xf32> to vector<16x128xf32>
    %23 = arith.addf %20, %22 : vector<16x128xf32>
    %c64_i32 = arith.constant 64 : i32
    %24 = tpu.dynamic_rotate %23 by %c64_i32 dim 1 : vector<16x128xf32>, i32 -> vector<16x128xf32>
    %25 = arith.mulf %23, %24 : vector<16x128xf32>
    %c32_i32 = arith.constant 32 : i32
    %26 = tpu.dynamic_rotate %25 by %c32_i32 dim 1 : vector<16x128xf32>, i32 -> vector<16x128xf32>
    %27 = arith.addf %25, %26 : vector<16x128xf32>
    %c16_i32 = arith.constant 16 : i32
    %28 = tpu.dynamic_rotate %27 by %c16_i32 dim 1 : vector<16x128xf32>, i32 -> vector<16x128xf32>
    %29 = arith.addf %27, %28 : vector<16x128xf32>
    %30 = vector.extract_strided_slice %29 {offsets = [0, 0], sizes = [16, 16], strides = [1, 1]} : vector<16x128xf32> to vector<16x16xf32>
    %c0_20 = arith.constant 0 : index
    %c0_21 = arith.constant 0 : index
    %31 = vector.load %arg10[%c0_20, %c0_21] : memref<1x16xf32, #tpu.memory_space<vmem>>, vector<1x16xf32>
    %32 = vector.broadcast %31 : vector<1x16xf32> to vector<16x16xf32>
    %33 = arith.addf %30, %32 : vector<16x16xf32>
    %c0_22 = arith.constant 0 : index
    %c0_23 = arith.constant 0 : index
    %34 = vector.load %arg11[%c0_22, %c0_23] : memref<16x16xf32, #tpu.memory_space<vmem>>, vector<16x16xf32>
    tpu.vector_store %arg11[%c0_22, %c0_23], %33 {strides = array<i32>} : memref<16x16xf32, #tpu.memory_space<vmem>>, vector<16x16xf32>,
    return
  }
  func.func @transform_0(%arg0: i32) -> (i32, i32) {
    %c0_i32 = arith.constant 0 : i32
    %c0_i32_0 = arith.constant 0 : i32
    return %arg0, %c0_i32 : i32, i32
  }
  func.func @transform_1(%arg0: i32) -> (i32, i32) {
    %c0_i32 = arith.constant 0 : i32
    %c0_i32_0 = arith.constant 0 : i32
    %c0_i32_1 = arith.constant 0 : i32
    return %c0_i32, %c0_i32_0 : i32, i32
  }
  func.func @transform_2(%arg0: i32) -> (i32, i32) {
    %c0_i32 = arith.constant 0 : i32
    %c0_i32_0 = arith.constant 0 : i32
    %c0_i32_1 = arith.constant 0 : i32
    return %c0_i32, %c0_i32_0 : i32, i32
  }
  func.func @transform_3(%arg0: i32) -> (i32, i32) {
    %c0_i32 = arith.constant 0 : i32
    %c0_i32_0 = arith.constant 0 : i32
    %c0_i32_1 = arith.constant 0 : i32
    return %c0_i32, %c0_i32_0 : i32, i32
  }
  func.func @transform_4(%arg0: i32) -> (i32, i32) {
    %c0_i32 = arith.constant 0 : i32
    %c0_i32_0 = arith.constant 0 : i32
    %c0_i32_1 = arith.constant 0 : i32
    return %c0_i32, %c0_i32_0 : i32, i32
  }
  func.func @transform_5(%arg0: i32) -> (i32, i32) {
    %c0_i32 = arith.constant 0 : i32
    %c0_i32_0 = arith.constant 0 : i32
    %c0_i32_1 = arith.constant 0 : i32
    return %c0_i32, %c0_i32_0 : i32, i32
  }
  func.func @transform_6(%arg0: i32) -> (i32, i32) {
    %c0_i32 = arith.constant 0 : i32
    %c0_i32_0 = arith.constant 0 : i32
    %c0_i32_1 = arith.constant 0 : i32
    return %c0_i32, %c0_i32_0 : i32, i32
  }
  func.func @transform_7(%arg0: i32) -> (i32, i32) {
    %c0_i32 = arith.constant 0 : i32
    %c0_i32_0 = arith.constant 0 : i32
    %c0_i32_1 = arith.constant 0 : i32
    return %c0_i32, %c0_i32_0 : i32, i32
  }
  func.func @transform_8(%arg0: i32) -> (i32, i32) {
    %c0_i32 = arith.constant 0 : i32
    %c0_i32_0 = arith.constant 0 : i32
    %c0_i32_1 = arith.constant 0 : i32
    return %c0_i32, %c0_i32_0 : i32, i32
  }
  func.func @transform_9(%arg0: i32) -> (i32, i32) {
    %c0_i32 = arith.constant 0 : i32
    %c0_i32_0 = arith.constant 0 : i32
    %c0_i32_1 = arith.constant 0 : i32
    return %c0_i32, %c0_i32_0 : i32, i32
  }
  func.func @transform_10(%arg0: i32) -> (i32, i32) {
    %c0_i32 = arith.constant 0 : i32
    %c0_i32_0 = arith.constant 0 : i32
    return %arg0, %c0_i32 : i32, i32
  }
}

</mosaic_0001>

<llo_original>
// kernel: psd_forward.1
$region0: #{psd_forward.1}
  #allocation0 [shape = 'u32[]', space=smem, size = 0x4, offset = 0x4, fixed_abs, tag = 'smem constant byte address 0x4 - core index']
  #allocation1 [shape = 'u32[144,128]{1,0:T(1,128)}', space=vmem, size = 0x12000, scoped, tag = 'internal scratch']
  %s0 = inlined_call_operand.vmem [shape: f32[64,8], index: 0, kind: input, shape index: {}]
  %s1 = inlined_call_operand.hbm [shape: f32[8,32], index: 1, kind: input, shape index: {}]
  %s2 = inlined_call_operand.vmem [shape: f32[1,32], index: 2, kind: input, shape index: {}]
  %s3 = inlined_call_operand.vmem [shape: f32[32,32], index: 3, kind: input, shape index: {}]
  %s4 = inlined_call_operand.vmem [shape: f32[1,32], index: 4, kind: input, shape index: {}]
  %s5 = inlined_call_operand.vmem [shape: f32[32,32], index: 5, kind: input, shape index: {}]
  %s6 = inlined_call_operand.hbm [shape: f32[1,32], index: 6, kind: input, shape index: {}]
  %s7 = inlined_call_operand.vmem [shape: f32[32,128], index: 7, kind: input, shape index: {}]
  %s8 = inlined_call_operand.vmem [shape: f32[1,128], index: 8, kind: input, shape index: {}]
  %s9 = inlined_call_operand.vmem [shape: f32[1,16], index: 9, kind: input, shape index: {}]
  %s10 = inlined_call_operand.vmem [shape: f32[64,16], index: 10, kind: output, shape index: {}]
  %s11 = sld [smem:[#allocation0]]
  $region81: #{psd_forward.1} parent=0
    _
  %s13 = ssub.s32 1, %s11
  %s14 = scalar_select 0, %s13, %s11
  $region1: #{psd_forward.1} parent=0
    #allocation2 [shape = 'u8[4096]{0}', space=vmem, size = 0x1000, scoped, tag = 'input window, operand 1, single buffered']
    #allocation3 [shape = 's32[2]{0}', space=sflag, size = 0x8, scoped, tag = 'scoped memory for psd_forward.1']
    #allocation4 [shape = 'u8[512]{0}', space=vmem, size = 0x400, scoped, tag = 'input window, operand 6, single buffered']
    #allocation5 [shape = 's32[1]{0}', space=sflag, size = 0x4, scoped, tag = 'scoped memory for psd_forward.1']
    %15 = vsyncpa [#allocation3], 0
    %16 = vsyncpa [#allocation5], 0
    loop: start=0, step=1, limit=6
    $region2: #{psd_forward.1} parent=1 // loop_pre_header
      _
    $region3: #{psd_forward.1} parent=1 // loop_header
      %s18 = sphi 0, %s22
      %p19 = scmp.ge.s32.totalorder %s18, 6
      %s28 = sphi 0, %s30
      %s31 = sphi 0, %s28
      %s32 = sphi 0, %s31
      %s48 = sphi 0, %s32
      %s52 = sphi 0, %s52
      %s54 = sphi 0, %s52
      %s55 = sphi 0, %s54
      %s69 = sphi 0, %s55
      %s73 = sphi 0, %s73
      %s75 = sphi 0, %s73
      %s76 = sphi 0, %s75
      %s90 = sphi 0, %s76
      %s94 = sphi 0, %s94
      %s96 = sphi 0, %s94
      %s97 = sphi 0, %s96
      %s111 = sphi 0, %s97
      %s115 = sphi 0, %s115
      %s117 = sphi 0, %s115
      %s118 = sphi 0, %s117
      %s132 = sphi 0, %s118
      %s136 = sphi 0, %s136
      %s138 = sphi 0, %s136
      %s139 = sphi 0, %s138
      %s153 = sphi 0, %s139
      %s157 = sphi 0, %s157
      %s159 = sphi 0, %s157
      %s160 = sphi 0, %s159
      %s174 = sphi 0, %s160
      %s178 = sphi 0, %s178
      %s180 = sphi 0, %s178
      %s181 = sphi 0, %s180
      %s195 = sphi 0, %s181
      %s199 = sphi 0, %s199
      %s201 = sphi 0, %s199
      %s202 = sphi 0, %s201
      %s216 = sphi 0, %s202
      %s220 = sphi 0, %s220
      %s222 = sphi 0, %s220
      %s223 = sphi 0, %s222
      %s237 = sphi 0, %s223
      %s243 = sphi 0, %s245
      %s246 = sphi 0, %s243
      %s247 = sphi 0, %s246
      %s263 = sphi 0, %s247
    $region4: #{psd_forward.1} parent=1 // loop_header_branch
      %21 = sbr.rel (%p19) target = $region8
    $region5: #{psd_forward.1} parent=1 // loop_body
      %s23 = ssub.s32 %s18, 1
      %s24 = ssub.s32 %s18, 2
      %s25 = sadd.s32 %s18, 1
      %s26 = ssub.s32 %s18, %s25
      %p27 = scmp.eq.s32.totalorder %s26, 0
      %s29 = sadd.s32 %s28, 1
      %s30 = scalar_select %p27, %s28, %s29
      %p33 = pneg %p27
      %p34 = scmp.eq.s32.totalorder %s18, 3
      %p35 = por %p33, %p34
      %p36 = scmp.ne.s32.totalorder %s28, %s31
      %p37 = scmp.eq.s32.totalorder %s18, 0
      %p38 = por %p36, %p37
      %p39 = scmp.ne.s32.totalorder %s28, %s31
      %p40 = scmp.eq.s32.totalorder %s23, 3
      %p41 = por %p39, %p40
      %p42 = scmp.ne.s32.totalorder %s31, %s32
      %p43 = scmp.eq.s32.totalorder %s23, 0
      %p44 = por %p42, %p43
      %p45 = scmp.ne.s32.totalorder %s31, %s32
      %p46 = scmp.eq.s32.totalorder %s24, 3
      %p47 = por %p45, %p46
      %p49 = scmp.ne.s32.totalorder %s32, %s48
      %p50 = scmp.eq.s32.totalorder %s24, 0
      %p51 = por %p49, %p50
      %s53 = sadd.s32 %s52, 1
      %p56 = scmp.eq.s32.totalorder %s18, 3
      %p57 = scmp.ne.s32.totalorder %s52, %s54
      %p58 = scmp.eq.s32.totalorder %s18, 0
      %p59 = por %p57, %p58
      %p60 = scmp.ne.s32.totalorder %s52, %s54
      %p61 = scmp.eq.s32.totalorder %s23, 3
      %p62 = por %p60, %p61
      %p63 = scmp.ne.s32.totalorder %s54, %s55
      %p64 = scmp.eq.s32.totalorder %s23, 0
      %p65 = por %p63, %p64
      %p66 = scmp.ne.s32.totalorder %s54, %s55
      %p67 = scmp.eq.s32.totalorder %s24, 3
      %p68 = por %p66, %p67
      %p70 = scmp.ne.s32.totalorder %s55, %s69
      %p71 = scmp.eq.s32.totalorder %s24, 0
      %p72 = por %p70, %p71
      %s74 = sadd.s32 %s73, 1
      %p77 = scmp.eq.s32.totalorder %s18, 3
      %p78 = scmp.ne.s32.totalorder %s73, %s75
      %p79 = scmp.eq.s32.totalorder %s18, 0
      %p80 = por %p78, %p79
      %p81 = scmp.ne.s32.totalorder %s73, %s75
      %p82 = scmp.eq.s32.totalorder %s23, 3
      %p83 = por %p81, %p82
      %p84 = scmp.ne.s32.totalorder %s75, %s76
      %p85 = scmp.eq.s32.totalorder %s23, 0
      %p86 = por %p84, %p85
      %p87 = scmp.ne.s32.totalorder %s75, %s76
      %p88 = scmp.eq.s32.totalorder %s24, 3
      %p89 = por %p87, %p88
      %p91 = scmp.ne.s32.totalorder %s76, %s90
      %p92 = scmp.eq.s32.totalorder %s24, 0
      %p93 = por %p91, %p92
      %s95 = sadd.s32 %s94, 1
      %p98 = scmp.eq.s32.totalorder %s18, 3
      %p99 = scmp.ne.s32.totalorder %s94, %s96
      %p100 = scmp.eq.s32.totalorder %s18, 0
      %p101 = por %p99, %p100
      %p102 = scmp.ne.s32.totalorder %s94, %s96
      %p103 = scmp.eq.s32.totalorder %s23, 3
      %p104 = por %p102, %p103
      %p105 = scmp.ne.s32.totalorder %s96, %s97
      %p106 = scmp.eq.s32.totalorder %s23, 0
      %p107 = por %p105, %p106
      %p108 = scmp.ne.s32.totalorder %s96, %s97
      %p109 = scmp.eq.s32.totalorder %s24, 3
      %p110 = por %p108, %p109
      %p112 = scmp.ne.s32.totalorder %s97, %s111
      %p113 = scmp.eq.s32.totalorder %s24, 0
      %p114 = por %p112, %p113
      %s116 = sadd.s32 %s115, 1
      %p119 = scmp.eq.s32.totalorder %s18, 3
      %p120 = scmp.ne.s32.totalorder %s115, %s117
      %p121 = scmp.eq.s32.totalorder %s18, 0
      %p122 = por %p120, %p121
      %p123 = scmp.ne.s32.totalorder %s115, %s117
      %p124 = scmp.eq.s32.totalorder %s23, 3
      %p125 = por %p123, %p124
      %p126 = scmp.ne.s32.totalorder %s117, %s118
      %p127 = scmp.eq.s32.totalorder %s23, 0
      %p128 = por %p126, %p127
      %p129 = scmp.ne.s32.totalorder %s117, %s118
      %p130 = scmp.eq.s32.totalorder %s24, 3
      %p131 = por %p129, %p130
      %p133 = scmp.ne.s32.totalorder %s118, %s132
      %p134 = scmp.eq.s32.totalorder %s24, 0
      %p135 = por %p133, %p134
      %s137 = sadd.s32 %s136, 1
      %p140 = scmp.eq.s32.totalorder %s18, 3
      %p141 = scmp.ne.s32.totalorder %s136, %s138
      %p142 = scmp.eq.s32.totalorder %s18, 0
      %p143 = por %p141, %p142
      %p144 = scmp.ne.s32.totalorder %s136, %s138
      %p145 = scmp.eq.s32.totalorder %s23, 3
      %p146 = por %p144, %p145
      %p147 = scmp.ne.s32.totalorder %s138, %s139
      %p148 = scmp.eq.s32.totalorder %s23, 0
      %p149 = por %p147, %p148
      %p150 = scmp.ne.s32.totalorder %s138, %s139
      %p151 = scmp.eq.s32.totalorder %s24, 3
      %p152 = por %p150, %p151
      %p154 = scmp.ne.s32.totalorder %s139, %s153
      %p155 = scmp.eq.s32.totalorder %s24, 0
      %p156 = por %p154, %p155
      %s158 = sadd.s32 %s157, 1
      %p161 = scmp.eq.s32.totalorder %s18, 3
      %p162 = scmp.ne.s32.totalorder %s157, %s159
      %p163 = scmp.eq.s32.totalorder %s18, 0
      %p164 = por %p162, %p163
      %p165 = scmp.ne.s32.totalorder %s157, %s159
      %p166 = scmp.eq.s32.totalorder %s23, 3
      %p167 = por %p165, %p166
      %p168 = scmp.ne.s32.totalorder %s159, %s160
      %p169 = scmp.eq.s32.totalorder %s23, 0
      %p170 = por %p168, %p169
      %p171 = scmp.ne.s32.totalorder %s159, %s160
      %p172 = scmp.eq.s32.totalorder %s24, 3
      %p173 = por %p171, %p172
      %p175 = scmp.ne.s32.totalorder %s160, %s174
      %p176 = scmp.eq.s32.totalorder %s24, 0
      %p177 = por %p175, %p176
      %s179 = sadd.s32 %s178, 1
      %p182 = scmp.eq.s32.totalorder %s18, 3
      %p183 = scmp.ne.s32.totalorder %s178, %s180
      %p184 = scmp.eq.s32.totalorder %s18, 0
      %p185 = por %p183, %p184
      %p186 = scmp.ne.s32.totalorder %s178, %s180
      %p187 = scmp.eq.s32.totalorder %s23, 3
      %p188 = por %p186, %p187
      %p189 = scmp.ne.s32.totalorder %s180, %s181
      %p190 = scmp.eq.s32.totalorder %s23, 0
      %p191 = por %p189, %p190
      %p192 = scmp.ne.s32.totalorder %s180, %s181
      %p193 = scmp.eq.s32.totalorder %s24, 3
      %p194 = por %p192, %p193
      %p196 = scmp.ne.s32.totalorder %s181, %s195
      %p197 = scmp.eq.s32.totalorder %s24, 0
      %p198 = por %p196, %p197
      %s200 = sadd.s32 %s199, 1
      %p203 = scmp.eq.s32.totalorder %s18, 3
      %p204 = scmp.ne.s32.totalorder %s199, %s201
      %p205 = scmp.eq.s32.totalorder %s18, 0
      %p206 = por %p204, %p205
      %p207 = scmp.ne.s32.totalorder %s199, %s201
      %p208 = scmp.eq.s32.totalorder %s23, 3
      %p209 = por %p207, %p208
      %p210 = scmp.ne.s32.totalorder %s201, %s202
      %p211 = scmp.eq.s32.totalorder %s23, 0
      %p212 = por %p210, %p211
      %p213 = scmp.ne.s32.totalorder %s201, %s202
      %p214 = scmp.eq.s32.totalorder %s24, 3
      %p215 = por %p213, %p214
      %p217 = scmp.ne.s32.totalorder %s202, %s216
      %p218 = scmp.eq.s32.totalorder %s24, 0
      %p219 = por %p217, %p218
      %s221 = sadd.s32 %s220, 1
      %p224 = scmp.eq.s32.totalorder %s18, 3
      %p225 = scmp.ne.s32.totalorder %s220, %s222
      %p226 = scmp.eq.s32.totalorder %s18, 0
      %p227 = por %p225, %p226
      %p228 = scmp.ne.s32.totalorder %s220, %s222
      %p229 = scmp.eq.s32.totalorder %s23, 3
      %p230 = por %p228, %p229
      %p231 = scmp.ne.s32.totalorder %s222, %s223
      %p232 = scmp.eq.s32.totalorder %s23, 0
      %p233 = por %p231, %p232
      %p234 = scmp.ne.s32.totalorder %s222, %s223
      %p235 = scmp.eq.s32.totalorder %s24, 3
      %p236 = por %p234, %p235
      %p238 = scmp.ne.s32.totalorder %s223, %s237
      %p239 = scmp.eq.s32.totalorder %s24, 0
      %p240 = por %p238, %p239
      %s241 = ssub.s32 %s18, %s25
      %p242 = scmp.eq.s32.totalorder %s241, 0
      %s244 = sadd.s32 %s243, 1
      %s245 = scalar_select %p242, %s243, %s244
      %p248 = pneg %p242
      %p249 = scmp.eq.s32.totalorder %s18, 3
      %p250 = por %p248, %p249
      %p251 = scmp.ne.s32.totalorder %s243, %s246
      %p252 = scmp.eq.s32.totalorder %s18, 0
      %p253 = por %p251, %p252
      %p254 = scmp.ne.s32.totalorder %s243, %s246
      %p255 = scmp.eq.s32.totalorder %s23, 3
      %p256 = por %p254, %p255
      %p257 = scmp.ne.s32.totalorder %s246, %s247
      %p258 = scmp.eq.s32.totalorder %s23, 0
      %p259 = por %p257, %p258
      %p260 = scmp.ne.s32.totalorder %s246, %s247
      %p261 = scmp.eq.s32.totalorder %s24, 3
      %p262 = por %p260, %p261
      %p264 = scmp.ne.s32.totalorder %s247, %s263
      %p265 = scmp.eq.s32.totalorder %s24, 0
      %p266 = por %p264, %p265
      %p267 = scmp.le.s32.totalorder 1, %s18
      %p268 = scmp.lt.s32.totalorder %s18, 5
      %p269 = pnand %p267, %p268
      %p270 = pneg %p269
      // Predicated region
      $region9: #{psd_forward.1} parent=5 // pred_check
        _
      $region10: #{psd_forward.1} parent=5 // pred_check_branch
        %272 = sbr.rel (%p269) target = $region12
      $region11: #{psd_forward.1} parent=5 // pred_region
        %s273 = ssub.s32 %s18, 1
        // Predicated region
        $region13: #{psd_forward.1} parent=11 // pred_check
          %p274 = pneg %p65
        $region14: #{psd_forward.1} parent=11 // pred_check_branch
          %276 = sbr.rel (%p274) target = $region16
        $region15: #{psd_forward.1} parent=11 // pred_region
          %s278 = ssub.s32 128, 128
          %279 = vsyncadd [#allocation3], %s278
          %s281 = sshll.u32 [#allocation2], 4
          %s282 = int_to_ptr.vmem [resolvable:$true] %s281
          %284 = dma.hbm_to_vmem [thread:$0]  %s1, 128, %s282, [#allocation3]
        $region16: #{psd_forward.1} parent=11 // pred_fallthru
          _
        // Predicated region
        $region17: #{psd_forward.1} parent=11 // pred_check
          %p285 = pneg %p86
        $region18: #{psd_forward.1} parent=11 // pred_check_branch
          %287 = sbr.rel (%p285) target = $region20
        $region19: #{psd_forward.1} parent=11 // pred_region
          _
        $region20: #{psd_forward.1} parent=11 // pred_fallthru
          _
        // Predicated region
        $region21: #{psd_forward.1} parent=11 // pred_check
          %p288 = pneg %p107
        $region22: #{psd_forward.1} parent=11 // pred_check_branch
          %290 = sbr.rel (%p288) target = $region24
        $region23: #{psd_forward.1} parent=11 // pred_region
          _
        $region24: #{psd_forward.1} parent=11 // pred_fallthru
          _
        // Predicated region
        $region25: #{psd_forward.1} parent=11 // pred_check
          %p291 = pneg %p128
        $region26: #{psd_forward.1} parent=11 // pred_check_branch
          %293 = sbr.rel (%p291) target = $region28
        $region27: #{psd_forward.1} parent=11 // pred_region
          _
        $region28: #{psd_forward.1} parent=11 // pred_fallthru
          _
        // Predicated region
        $region29: #{psd_forward.1} parent=11 // pred_check
          %p294 = pneg %p149
        $region30: #{psd_forward.1} parent=11 // pred_check_branch
          %296 = sbr.rel (%p294) target = $region32
        $region31: #{psd_forward.1} parent=11 // pred_region
          _
        $region32: #{psd_forward.1} parent=11 // pred_fallthru
          _
        // Predicated region
        $region33: #{psd_forward.1} parent=11 // pred_check
          %p297 = pneg %p170
        $region34: #{psd_forward.1} parent=11 // pred_check_branch
          %299 = sbr.rel (%p297) target = $region36
        $region35: #{psd_forward.1} parent=11 // pred_region
          %s301 = ssub.s32 16, 16
          %302 = vsyncadd [#allocation5], %s301
          %s304 = sshll.u32 [#allocation4], 4
          %s305 = int_to_ptr.vmem [resolvable:$true] %s304
          %307 = dma.hbm_to_vmem [thread:$0]  %s6, 16, %s305, [#allocation5]
        $region36: #{psd_forward.1} parent=11 // pred_fallthru
          _
        // Predicated region
        $region37: #{psd_forward.1} parent=11 // pred_check
          %p308 = pneg %p191
        $region38: #{psd_forward.1} parent=11 // pred_check_branch
          %310 = sbr.rel (%p308) target = $region40
        $region39: #{psd_forward.1} parent=11 // pred_region
          _
        $region40: #{psd_forward.1} parent=11 // pred_fallthru
          _
        // Predicated region
        $region41: #{psd_forward.1} parent=11 // pred_check
          %p311 = pneg %p212
        $region42: #{psd_forward.1} parent=11 // pred_check_branch
          %313 = sbr.rel (%p311) target = $region44
        $region43: #{psd_forward.1} parent=11 // pred_region
          _
        $region44: #{psd_forward.1} parent=11 // pred_fallthru
          _
        // Predicated region
        $region45: #{psd_forward.1} parent=11 // pred_check
          %p314 = pneg %p233
        $region46: #{psd_forward.1} parent=11 // pred_check_branch
          %316 = sbr.rel (%p314) target = $region48
        $region47: #{psd_forward.1} parent=11 // pred_region
          _
        $region48: #{psd_forward.1} parent=11 // pred_fallthru
          _
      $region12: #{psd_forward.1} parent=5 // pred_fallthru
        _
      %p317 = scmp.lt.s32.totalorder %s18, 4
      // Predicated region
      $region49: #{psd_forward.1} parent=5 // pred_check
        %p318 = pneg %p317
      $region50: #{psd_forward.1} parent=5 // pred_check_branch
        %320 = sbr.rel (%p318) target = $region52
      $region51: #{psd_forward.1} parent=5 // pred_region
        // Predicated region
        $region53: #{psd_forward.1} parent=51 // pred_check
          %p321 = pneg %p38
        $region54: #{psd_forward.1} parent=51 // pred_check_branch
          %323 = sbr.rel (%p321) target = $region56
        $region55: #{psd_forward.1} parent=51 // pred_region
          %s324 = smul.u32 2, %s18
          %p325 = scmp.lt.s32.totalorder %s324, 7
          %s326 = scalar_select %p325, %s324, 7
          %s327 = smul.addr %s326, 8
          %s328 = scalar_lea.vmem %s0, %s327
          %s329 = smul.u32 2, %s18
        $region56: #{psd_forward.1} parent=51 // pred_fallthru
          _
      $region52: #{psd_forward.1} parent=5 // pred_fallthru
        _
      %p330 = scmp.le.s32.totalorder 1, %s18
      %p331 = scmp.lt.s32.totalorder %s18, 5
      %p332 = pnand %p330, %p331
      %p333 = pneg %p332
      // Predicated region
      $region57: #{psd_forward.1} parent=5 // pred_check
        _
      $region58: #{psd_forward.1} parent=5 // pred_check_branch
        %335 = sbr.rel (%p332) target = $region60
      $region59: #{psd_forward.1} parent=5 // pred_region
        %s336 = ssub.s32 %s18, 1
        // Predicated region
        $region61: #{psd_forward.1} parent=59 // pred_check
          %p337 = pneg %p65
        $region62: #{psd_forward.1} parent=59 // pred_check_branch
          %339 = sbr.rel (%p337) target = $region64
        $region63: #{psd_forward.1} parent=59 // pred_region
          %340 = dma.done [#allocation3], 128
        $region64: #{psd_forward.1} parent=59 // pred_fallthru
          _
        // Predicated region
        $region65: #{psd_forward.1} parent=59 // pred_check
          %p341 = pneg %p170
        $region66: #{psd_forward.1} parent=59 // pred_check_branch
          %343 = sbr.rel (%p341) target = $region68
        $region67: #{psd_forward.1} parent=59 // pred_region
          %344 = dma.done [#allocation5], 16
        $region68: #{psd_forward.1} parent=59 // pred_fallthru
          _
        %s345 = smul.u32 2, %s23
        %p346 = scmp.lt.s32.totalorder %s345, 7
        %s347 = scalar_select %p346, %s345, 7
        %s348 = smul.addr %s347, 8
        %s349 = scalar_lea.vmem %s0, %s348
        %p350 = pneg %p44
        %p351 = pneg %p41
        %p352 = pneg %p65
        %p353 = pneg %p62
        %p354 = pneg %p86
        %p355 = pneg %p83
        %p356 = pneg %p107
        %p357 = pneg %p104
        %p358 = pneg %p128
        %p359 = pneg %p125
        %p360 = pneg %p149
        %p361 = pneg %p146
        %p362 = pneg %p170
        %p363 = pneg %p167
        %p364 = pneg %p191
        %p365 = pneg %p188
        %p366 = pneg %p212
        %p367 = pneg %p209
        %p368 = pneg %p233
        %p369 = pneg %p230
        %p370 = pneg %p259
        %p371 = pneg %p256
        %s372 = smul.u32 2, %s23
        %p373 = scmp.lt.s32.totalorder %s372, 7
        %s374 = scalar_select %p373, %s372, 7
        %s375 = smul.addr %s374, 8
        %s376 = scalar_lea.vmem %s10, %s375
        %s377 = smul.u32 2, %s23
        %p378 = scmp.lt.s32.totalorder %s377, 7
        %s379 = scalar_select %p378, %s377, 7
        %s380 = smul.addr %s379, 8
        %s381 = scalar_lea.vmem %s0, %s380
        %s382 = smul.u32 2, %s23
        %s383 = smul.u32 2, %s23
        %p384 = scmp.lt.s32.totalorder %s383, 7
        %s385 = scalar_select %p384, %s383, 7
        %s386 = smul.addr %s385, 8
        %s387 = scalar_lea.vmem %s10, %s386
        %s388 = smul.u32 2, %s23
        %v389 = vld [vmem:[%s381] sm:$0xff]
        %v390 = vld [vmem:[%s381 + $0x8] sm:$0xff]
        %v391 = vld [vmem:[#allocation2] sm:$0xff]
        %v392 = vld [vmem:[%s2] sm:$0x1]
        %v394 = vlaneseq
        %v395 = vshrl.u32 %v394, 7
        %v396 = vsub.s32 0, %v395
        %v397 = vrot.slane %v392, %v396
        %vm399 = vcmask 64512
        %v401 = vsel %vm399, %v389, 0
        %v404 = vsel %vm399, %v390, 0
        %406 = vmatprep.subr.mxu0 0.0
        %407 = vmatpush1.msra.mxu0 %v391
        %408 = vmatprep.subr.mxu0 0.0
        %409 = vmatpush1.msra.mxu0 0.0
        %410 = vmatprep.subr.mxu0 0.0
        %411 = vmatpush1.msra.mxu0 0.0
        %412 = vmatprep.subr.mxu0 0.0
        %413 = vmatpush1.msra.mxu0 0.0
        %414 = vmatprep.subr.mxu0 0.0
        %415 = vmatpush1.msra.mxu0 0.0
        %416 = vmatprep.subr.mxu0 0.0
        %417 = vmatpush1.msra.mxu0 0.0
        %418 = vmatprep.subr.mxu0 0.0
        %419 = vmatpush1.msra.mxu0 0.0
        %420 = vmatprep.subr.mxu0 0.0
        %421 = vmatpush1.msra.mxu0 0.0
        %422 = vmatprep.subr.mxu0 0.0
        %423 = vmatpush1.msra.mxu0 0.0
        %424 = vmatprep.subr.mxu0 0.0
        %425 = vmatpush1.msra.mxu0 0.0
        %426 = vmatprep.subr.mxu0 0.0
        %427 = vmatpush1.msra.mxu0 0.0
        %428 = vmatprep.subr.mxu0 0.0
        %429 = vmatpush1.msra.mxu0 0.0
        %430 = vmatprep.subr.mxu0 0.0
        %431 = vmatpush1.msra.mxu0 0.0
        %432 = vmatprep.subr.mxu0 0.0
        %433 = vmatpush1.msra.mxu0 0.0
        %434 = vmatprep.subr.mxu0 0.0
        %435 = vmatpush1.msra.mxu0 0.0
        %436 = vmatprep.subr.mxu0 0.0
        %437 = vmatpush1.msra.mxu0 0.0
        %438 = vmatprep.subr.mxu0 0.0
        %439 = vmatpush1.msra.mxu0 0.0
        %440 = vmatprep.subr.mxu0 0.0
        %441 = vmatpush1.msra.mxu0 0.0
        %442 = vmatprep.subr.mxu0 0.0
        %443 = vmatpush1.msra.mxu0 0.0
        %444 = vmatprep.subr.mxu0 0.0
        %445 = vmatpush1.msra.mxu0 0.0
        %446 = vmatprep.subr.mxu0 0.0
        %447 = vmatpush1.msra.mxu0 0.0
        %448 = vmatprep.subr.mxu0 0.0
        %449 = vmatpush1.msra.mxu0 0.0
        %450 = vmatprep.subr.mxu0 0.0
        %451 = vmatpush1.msra.mxu0 0.0
        %452 = vmatprep.subr.mxu0 0.0
        %453 = vmatpush1.msra.mxu0 0.0
        %454 = vmatprep.subr.mxu0 0.0
        %455 = vmatpush1.msra.mxu0 0.0
        %456 = vmatprep.subr.mxu0 0.0
        %457 = vmatpush1.msra.mxu0 0.0
        %458 = vmatprep.subr.mxu0 0.0
        %459 = vmatpush1.msra.mxu0 0.0
        %460 = vmatprep.subr.mxu0 0.0
        %461 = vmatpush1.msra.mxu0 0.0
        %462 = vmatprep.subr.mxu0 0.0
        %463 = vmatpush1.msra.mxu0 0.0
        %464 = vmatprep.subr.mxu0 0.0
        %465 = vmatpush1.msra.mxu0 0.0
        %466 = vmatprep.subr.mxu0 0.0
        %467 = vmatpush1.msra.mxu0 0.0
        %468 = vmatprep.subr.mxu0 0.0
        %469 = vmatpush1.msra.mxu0 0.0
        %470 = vmatprep.mubr.f32.mxu0 0.0
        %471 = vmatmul.mubr.f32.gmra.mrb[0].mxu0 %v401
        %v472 = vpop.f32.mrb[0].mxu0
        %v473 = vadd.f32 %v397, %v472
        %v474 = vpop.f32.mrb[0].mxu0
        %475 = vmatprep.mubr.f32.mxu0 0.0
        %476 = vmatmul.mubr.f32.gmra.mrb[0].mxu0 %v404
        %v477 = vpop.f32.mrb[0].mxu0
        %v478 = vadd.f32 %v397, %v477
        %v479 = vpop.f32.mrb[0].mxu0
        %480 = vdwg.mxu0
        %v481 = vtanh.pop %v473
        %v482 = vtanh.pop %v478
        %v483 = vld [vmem:[%s3] sm:$0xff]
        %v484 = vld [vmem:[%s3 + $0x8] sm:$0xff]
        %v485 = vld [vmem:[%s3 + $0x10] sm:$0xff]
        %v486 = vld [vmem:[%s3 + $0x18] sm:$0xff]
        %v487 = vld [vmem:[%s4] sm:$0x1]
        %v489 = vlaneseq
        %v490 = vshrl.u32 %v489, 7
        %v491 = vsub.s32 0, %v490
        %v492 = vrot.slane %v487, %v491
        %vm494 = vcmask 261120
        %v496 = vsel %vm494, %v481, 0
        %v499 = vsel %vm494, %v482, 0
        %501 = vmatprep.subr.mxu0 0.0
        %502 = vmatpush1.msra.mxu0 %v483
        %503 = vmatprep.subr.mxu0 0.0
        %504 = vmatpush1.msra.mxu0 %v484
        %505 = vmatprep.subr.mxu0 0.0
        %506 = vmatpush1.msra.mxu0 %v485
        %507 = vmatprep.subr.mxu0 0.0
        %508 = vmatpush1.msra.mxu0 %v486
        %509 = vmatprep.subr.mxu0 0.0
        %510 = vmatpush1.msra.mxu0 0.0
        %511 = vmatprep.subr.mxu0 0.0
        %512 = vmatpush1.msra.mxu0 0.0
        %513 = vmatprep.subr.mxu0 0.0
        %514 = vmatpush1.msra.mxu0 0.0
        %515 = vmatprep.subr.mxu0 0.0
        %516 = vmatpush1.msra.mxu0 0.0
        %517 = vmatprep.subr.mxu0 0.0
        %518 = vmatpush1.msra.mxu0 0.0
        %519 = vmatprep.subr.mxu0 0.0
        %520 = vmatpush1.msra.mxu0 0.0
        %521 = vmatprep.subr.mxu0 0.0
        %522 = vmatpush1.msra.mxu0 0.0
        %523 = vmatprep.subr.mxu0 0.0
        %524 = vmatpush1.msra.mxu0 0.0
        %525 = vmatprep.subr.mxu0 0.0
        %526 = vmatpush1.msra.mxu0 0.0
        %527 = vmatprep.subr.mxu0 0.0
        %528 = vmatpush1.msra.mxu0 0.0
        %529 = vmatprep.subr.mxu0 0.0
        %530 = vmatpush1.msra.mxu0 0.0
        %531 = vmatprep.subr.mxu0 0.0
        %532 = vmatpush1.msra.mxu0 0.0
        %533 = vmatprep.subr.mxu0 0.0
        %534 = vmatpush1.msra.mxu0 0.0
        %535 = vmatprep.subr.mxu0 0.0
        %536 = vmatpush1.msra.mxu0 0.0
        %537 = vmatprep.subr.mxu0 0.0
        %538 = vmatpush1.msra.mxu0 0.0
        %539 = vmatprep.subr.mxu0 0.0
        %540 = vmatpush1.msra.mxu0 0.0
        %541 = vmatprep.subr.mxu0 0.0
        %542 = vmatpush1.msra.mxu0 0.0
        %543 = vmatprep.subr.mxu0 0.0
        %544 = vmatpush1.msra.mxu0 0.0
        %545 = vmatprep.subr.mxu0 0.0
        %546 = vmatpush1.msra.mxu0 0.0
        %547 = vmatprep.subr.mxu0 0.0
        %548 = vmatpush1.msra.mxu0 0.0
        %549 = vmatprep.subr.mxu0 0.0
        %550 = vmatpush1.msra.mxu0 0.0
        %551 = vmatprep.subr.mxu0 0.0
        %552 = vmatpush1.msra.mxu0 0.0
        %553 = vmatprep.subr.mxu0 0.0
        %554 = vmatpush1.msra.mxu0 0.0
        %555 = vmatprep.subr.mxu0 0.0
        %556 = vmatpush1.msra.mxu0 0.0
        %557 = vmatprep.subr.mxu0 0.0
        %558 = vmatpush1.msra.mxu0 0.0
        %559 = vmatprep.subr.mxu0 0.0
        %560 = vmatpush1.msra.mxu0 0.0
        %561 = vmatprep.subr.mxu0 0.0
        %562 = vmatpush1.msra.mxu0 0.0
        %563 = vmatprep.subr.mxu0 0.0
        %564 = vmatpush1.msra.mxu0 0.0
        %565 = vmatprep.mubr.f32.mxu0 0.0
        %566 = vmatmul.mubr.f32.gmra.mrb[0].mxu0 %v496
        %v567 = vpop.f32.mrb[0].mxu0
        %v568 = vadd.f32 %v492, %v567
        %v569 = vpop.f32.mrb[0].mxu0
        %570 = vmatprep.mubr.f32.mxu0 0.0
        %571 = vmatmul.mubr.f32.gmra.mrb[0].mxu0 %v499
        %v572 = vpop.f32.mrb[0].mxu0
        %v573 = vadd.f32 %v492, %v572
        %v574 = vpop.f32.mrb[0].mxu0
        %575 = vdwg.mxu0
        %v576 = vtanh.pop %v568
        %v577 = vtanh.pop %v573
        %v578 = vld [vmem:[%s5] sm:$0xff]
        %v579 = vld [vmem:[%s5 + $0x8] sm:$0xff]
        %v580 = vld [vmem:[%s5 + $0x10] sm:$0xff]
        %v581 = vld [vmem:[%s5 + $0x18] sm:$0xff]
        %v582 = vld [vmem:[#allocation4] sm:$0x1]
        %v584 = vlaneseq
        %v585 = vshrl.u32 %v584, 7
        %v586 = vsub.s32 0, %v585
        %v587 = vrot.slane %v582, %v586
        %v590 = vsel %vm494, %v576, 0
        %v593 = vsel %vm494, %v577, 0
        %595 = vmatprep.subr.mxu0 0.0
        %596 = vmatpush1.msra.mxu0 %v578
        %597 = vmatprep.subr.mxu0 0.0
        %598 = vmatpush1.msra.mxu0 %v579
        %599 = vmatprep.subr.mxu0 0.0
        %600 = vmatpush1.msra.mxu0 %v580
        %601 = vmatprep.subr.mxu0 0.0
        %602 = vmatpush1.msra.mxu0 %v581
        %603 = vmatprep.subr.mxu0 0.0
        %604 = vmatpush1.msra.mxu0 0.0
        %605 = vmatprep.subr.mxu0 0.0
        %606 = vmatpush1.msra.mxu0 0.0
        %607 = vmatprep.subr.mxu0 0.0
        %608 = vmatpush1.msra.mxu0 0.0
        %609 = vmatprep.subr.mxu0 0.0
        %610 = vmatpush1.msra.mxu0 0.0
        %611 = vmatprep.subr.mxu0 0.0
        %612 = vmatpush1.msra.mxu0 0.0
        %613 = vmatprep.subr.mxu0 0.0
        %614 = vmatpush1.msra.mxu0 0.0
        %615 = vmatprep.subr.mxu0 0.0
        %616 = vmatpush1.msra.mxu0 0.0
        %617 = vmatprep.subr.mxu0 0.0
        %618 = vmatpush1.msra.mxu0 0.0
        %619 = vmatprep.subr.mxu0 0.0
        %620 = vmatpush1.msra.mxu0 0.0
        %621 = vmatprep.subr.mxu0 0.0
        %622 = vmatpush1.msra.mxu0 0.0
        %623 = vmatprep.subr.mxu0 0.0
        %624 = vmatpush1.msra.mxu0 0.0
        %625 = vmatprep.subr.mxu0 0.0
        %626 = vmatpush1.msra.mxu0 0.0
        %627 = vmatprep.subr.mxu0 0.0
        %628 = vmatpush1.msra.mxu0 0.0
        %629 = vmatprep.subr.mxu0 0.0
        %630 = vmatpush1.msra.mxu0 0.0
        %631 = vmatprep.subr.mxu0 0.0
        %632 = vmatpush1.msra.mxu0 0.0
        %633 = vmatprep.subr.mxu0 0.0
        %634 = vmatpush1.msra.mxu0 0.0
        %635 = vmatprep.subr.mxu0 0.0
        %636 = vmatpush1.msra.mxu0 0.0
        %637 = vmatprep.subr.mxu0 0.0
        %638 = vmatpush1.msra.mxu0 0.0
        %639 = vmatprep.subr.mxu0 0.0
        %640 = vmatpush1.msra.mxu0 0.0
        %641 = vmatprep.subr.mxu0 0.0
        %642 = vmatpush1.msra.mxu0 0.0
        %643 = vmatprep.subr.mxu0 0.0
        %644 = vmatpush1.msra.mxu0 0.0
        %645 = vmatprep.subr.mxu0 0.0
        %646 = vmatpush1.msra.mxu0 0.0
        %647 = vmatprep.subr.mxu0 0.0
        %648 = vmatpush1.msra.mxu0 0.0
        %649 = vmatprep.subr.mxu0 0.0
        %650 = vmatpush1.msra.mxu0 0.0
        %651 = vmatprep.subr.mxu0 0.0
        %652 = vmatpush1.msra.mxu0 0.0
        %653 = vmatprep.subr.mxu0 0.0
        %654 = vmatpush1.msra.mxu0 0.0
        %655 = vmatprep.subr.mxu0 0.0
        %656 = vmatpush1.msra.mxu0 0.0
        %657 = vmatprep.subr.mxu0 0.0
        %658 = vmatpush1.msra.mxu0 0.0
        %659 = vmatprep.mubr.f32.mxu0 0.0
        %660 = vmatmul.mubr.f32.gmra.mrb[0].mxu0 %v590
        %v661 = vpop.f32.mrb[0].mxu0
        %v662 = vadd.f32 %v587, %v661
        %v663 = vpop.f32.mrb[0].mxu0
        %664 = vmatprep.mubr.f32.mxu0 0.0
        %665 = vmatmul.mubr.f32.gmra.mrb[0].mxu0 %v593
        %v666 = vpop.f32.mrb[0].mxu0
        %v667 = vadd.f32 %v587, %v666
        %v668 = vpop.f32.mrb[0].mxu0
        %669 = vdwg.mxu0
        %v670 = vtanh.pop %v662
        %v671 = vtanh.pop %v667
        %v672 = vld [vmem:[%s7] sm:$0xff]
        %v673 = vld [vmem:[%s7 + $0x8] sm:$0xff]
        %v674 = vld [vmem:[%s7 + $0x10] sm:$0xff]
        %v675 = vld [vmem:[%s7 + $0x18] sm:$0xff]
        %v676 = vld [vmem:[%s8] sm:$0x1]
        %v678 = vlaneseq
        %v679 = vshrl.u32 %v678, 7
        %v680 = vsub.s32 0, %v679
        %v681 = vrot.slane %v676, %v680
        %v684 = vsel %vm494, %v670, 0
        %v687 = vsel %vm494, %v671, 0
        %689 = vmatprep.subr.mxu0 0.0
        %690 = vmatpush1.msra.mxu0 %v672
        %691 = vmatprep.subr.mxu0 0.0
        %692 = vmatpush1.msra.mxu0 %v673
        %693 = vmatprep.subr.mxu0 0.0
        %694 = vmatpush1.msra.mxu0 %v674
        %695 = vmatprep.subr.mxu0 0.0
        %696 = vmatpush1.msra.mxu0 %v675
        %697 = vmatprep.subr.mxu0 0.0
        %698 = vmatpush1.msra.mxu0 0.0
        %699 = vmatprep.subr.mxu0 0.0
        %700 = vmatpush1.msra.mxu0 0.0
        %701 = vmatprep.subr.mxu0 0.0
        %702 = vmatpush1.msra.mxu0 0.0
        %703 = vmatprep.subr.mxu0 0.0
        %704 = vmatpush1.msra.mxu0 0.0
        %705 = vmatprep.subr.mxu0 0.0
        %706 = vmatpush1.msra.mxu0 0.0
        %707 = vmatprep.subr.mxu0 0.0
        %708 = vmatpush1.msra.mxu0 0.0
        %709 = vmatprep.subr.mxu0 0.0
        %710 = vmatpush1.msra.mxu0 0.0
        %711 = vmatprep.subr.mxu0 0.0
        %712 = vmatpush1.msra.mxu0 0.0
        %713 = vmatprep.subr.mxu0 0.0
        %714 = vmatpush1.msra.mxu0 0.0
        %715 = vmatprep.subr.mxu0 0.0
        %716 = vmatpush1.msra.mxu0 0.0
        %717 = vmatprep.subr.mxu0 0.0
        %718 = vmatpush1.msra.mxu0 0.0
        %719 = vmatprep.subr.mxu0 0.0
        %720 = vmatpush1.msra.mxu0 0.0
        %721 = vmatprep.subr.mxu0 0.0
        %722 = vmatpush1.msra.mxu0 0.0
        %723 = vmatprep.subr.mxu0 0.0
        %724 = vmatpush1.msra.mxu0 0.0
        %725 = vmatprep.subr.mxu0 0.0
        %726 = vmatpush1.msra.mxu0 0.0
        %727 = vmatprep.subr.mxu0 0.0
        %728 = vmatpush1.msra.mxu0 0.0
        %729 = vmatprep.subr.mxu0 0.0
        %730 = vmatpush1.msra.mxu0 0.0
        %731 = vmatprep.subr.mxu0 0.0
        %732 = vmatpush1.msra.mxu0 0.0
        %733 = vmatprep.subr.mxu0 0.0
        %734 = vmatpush1.msra.mxu0 0.0
        %735 = vmatprep.subr.mxu0 0.0
        %736 = vmatpush1.msra.mxu0 0.0
        %737 = vmatprep.subr.mxu0 0.0
        %738 = vmatpush1.msra.mxu0 0.0
        %739 = vmatprep.subr.mxu0 0.0
        %740 = vmatpush1.msra.mxu0 0.0
        %741 = vmatprep.subr.mxu0 0.0
        %742 = vmatpush1.msra.mxu0 0.0
        %743 = vmatprep.subr.mxu0 0.0
        %744 = vmatpush1.msra.mxu0 0.0
        %745 = vmatprep.subr.mxu0 0.0
        %746 = vmatpush1.msra.mxu0 0.0
        %747 = vmatprep.subr.mxu0 0.0
        %748 = vmatpush1.msra.mxu0 0.0
        %749 = vmatprep.subr.mxu0 0.0
        %750 = vmatpush1.msra.mxu0 0.0
        %751 = vmatprep.subr.mxu0 0.0
        %752 = vmatpush1.msra.mxu0 0.0
        %753 = vmatprep.mubr.f32.mxu0 0.0
        %754 = vmatmul.mubr.f32.gmra.mrb[0].mxu0 %v684
        %v755 = vpop.f32.mrb[0].mxu0
        %v756 = vadd.f32 %v681, %v755
        %v757 = vpop.f32.mrb[0].mxu0
        %758 = vmatprep.mubr.f32.mxu0 0.0
        %759 = vmatmul.mubr.f32.gmra.mrb[0].mxu0 %v687
        %v760 = vpop.f32.mrb[0].mxu0
        %v761 = vadd.f32 %v681, %v760
        %v762 = vpop.f32.mrb[0].mxu0
        %763 = vdwg.mxu0
        %764 = vrot.lane.b32.xlu0 %v756, 64
        %v765 = vpop.permute.xlu0 %764
        %766 = vrot.lane.b32.xlu0 %v761, 64
        %v767 = vpop.permute.xlu0 %766
        %v768 = vmul.f32 %v756, %v765
        %v769 = vmul.f32 %v761, %v767
        %770 = vrot.lane.b32.xlu0 %v768, 32
        %v771 = vpop.permute.xlu0 %770
        %772 = vrot.lane.b32.xlu0 %v769, 32
        %v773 = vpop.permute.xlu0 %772
        %v774 = vadd.f32 %v768, %v771
        %v775 = vadd.f32 %v769, %v773
        %776 = vrot.lane.b32.xlu0 %v774, 16
        %v777 = vpop.permute.xlu0 %776
        %778 = vrot.lane.b32.xlu0 %v775, 16
        %v779 = vpop.permute.xlu0 %778
        %v780 = vadd.f32 %v774, %v777
        %v781 = vadd.f32 %v775, %v779
        %v782 = vld [vmem:[%s9] sm:$0x1]
        %v784 = vlaneseq
        %v785 = vshrl.u32 %v784, 7
        %v786 = vsub.s32 0, %v785
        %v787 = vrot.slane %v782, %v786
        %v789 = vadd.f32 %v780, %v787
        %v790 = vadd.f32 %v781, %v787
        %vm791 = vcmask 130048
        %792 = vst.msk [vmem:[%s387] sm:$0xff] %vm791, %v789
        %793 = vst.msk [vmem:[%s387 + $0x8] sm:$0xff] %vm791, %v790
        %s794 = smul.u32 2, %s23
        %p795 = scmp.lt.s32.totalorder %s794, 7
        %s796 = scalar_select %p795, %s794, 7
        %s797 = smul.addr %s796, 8
        %s798 = scalar_lea.vmem %s10, %s797
        // Predicated region
        $region69: #{psd_forward.1} parent=59 // pred_check
          %p799 = pneg %p256
        $region70: #{psd_forward.1} parent=59 // pred_check_branch
          %801 = sbr.rel (%p799) target = $region72
        $region71: #{psd_forward.1} parent=59 // pred_region
          %s802 = smul.u32 2, %s23
        $region72: #{psd_forward.1} parent=59 // pred_fallthru
          _
      $region60: #{psd_forward.1} parent=5 // pred_fallthru
        _
      %p803 = scmp.le.s32.totalorder 2, %s18
      // Predicated region
      $region73: #{psd_forward.1} parent=5 // pred_check
        %p804 = pneg %p803
      $region74: #{psd_forward.1} parent=5 // pred_check_branch
        %806 = sbr.rel (%p804) target = $region76
      $region75: #{psd_forward.1} parent=5 // pred_region
        %s807 = ssub.s32 %s18, 2
        // Predicated region
        $region77: #{psd_forward.1} parent=75 // pred_check
          %p808 = pneg %p262
        $region78: #{psd_forward.1} parent=75 // pred_check_branch
          %810 = sbr.rel (%p808) target = $region80
        $region79: #{psd_forward.1} parent=75 // pred_region
          %s811 = smul.u32 2, %s24
          %p812 = scmp.lt.s32.totalorder %s811, 7
          %s813 = scalar_select %p812, %s811, 7
          %s814 = smul.addr %s813, 8
          %s815 = scalar_lea.vmem %s10, %s814
        $region80: #{psd_forward.1} parent=75 // pred_fallthru
          _
      $region76: #{psd_forward.1} parent=5 // pred_fallthru
        _
    $region6: #{psd_forward.1} parent=1 // loop_footer
      %s22 = sadd.s32 1, %s18
    $region7: #{psd_forward.1} parent=1 // loop_footer_branch
      %17 = sbr.rel target = $region3
    $region8: #{psd_forward.1} parent=1 // loop_exit
      _
    %816 = vsyncpa [#allocation3], 1
    %s817 = scalar_lea.sflag [#allocation3], 1
    %818 = vsyncpa %s817, 1
    %819 = vsyncpa [#allocation5], 1

</llo_original>
